<compile_context>
chip_gen: v7x
topology: tpu7x:2x2x1
jax: 0.10.0
libtpu: 0.0.40
codegen_flags: <defaults>
</compile_context>

<pallas_src>
import math

import jax
import jax.numpy as jnp
from jax.experimental import pallas as pl
from jax.experimental.pallas import tpu as pltpu


# ----------------------------- helpers (in-kernel math) -----------------------------

def _sigmoid(x):
    # 1/(1+exp(-x)); approx reciprocal uses the EUP slot (free in VPU-bound kernels)
    return pl.reciprocal(1.0 + jnp.exp(-x), approx=True)


def _softplus(x):
    # matches F.softplus (threshold 20)
    return jnp.where(x > 20.0, x, jnp.log(1.0 + jnp.exp(jnp.minimum(x, 20.0))))


def _pick_tile(n, candidates=(512, 256, 128, 64, 32, 16, 8)):
    for c in candidates:
        if c <= n and n % c == 0:
            return c
    return n


def _choose_tl(L):
    # L-chunk for the selective scan: 3*TL*N*D*4 bytes of scratch must stay well
    # under the scoped VMEM limit on every generation (v7x: 64 MiB physical).
    for c in (256, 128, 64, 32, 16, 8):
        if c < L and L % c == 0:
            return c
    return L


# ----------------------------- Pallas kernels -----------------------------

def ln_inproj_kernel(x_ref, g_ref, b_ref, wx_ref, wz_ref, xo_ref, zo_ref):
    # LayerNorm(x) fused with both halves of in_proj (x-branch and z-gate), bf16 MXU.
    x = x_ref[...]
    mu = jnp.mean(x, axis=-1, keepdims=True)
    xc = x - mu
    var = jnp.mean(xc * xc, axis=-1, keepdims=True)
    xn = xc * jax.lax.rsqrt(var + 1e-5) * g_ref[...] + b_ref[...]
    xnb = xn.astype(jnp.bfloat16)
    xo_ref[...] = jnp.dot(xnb, wx_ref[...], preferred_element_type=jnp.float32)
    zo_ref[...] = jnp.dot(xnb, wz_ref[...], preferred_element_type=jnp.float32)


def dwconv_silu_kernel(x_ref, w_ref, b_ref, o_ref):
    # x_ref: (H+2, W+2, C) zero-padded, w_ref: (9, C) depthwise taps, b_ref: (1, C)
    H, W, C = o_ref.shape
    acc = jnp.zeros((H, W, C), jnp.float32)
    for kh in range(3):
        for kw in range(3):
            tap = w_ref[kh * 3 + kw: kh * 3 + kw + 1, :]          # (1, C)
            acc = acc + x_ref[kh:kh + H, kw:kw + W, :] * tap
    acc = acc + b_ref[...]
    o_ref[...] = acc * _sigmoid(acc)                               # SiLU


def ss2d_core_kernel(xs_ref, xw_ref, dtw_ref, db_ref, A_ref, Dp_ref, o_ref,
                     h_scr, proj_scr, dA_scr, dbu_scr, H_scr):
    # grid = (K=4 directions, B, L//TL chunks).  Per chunk tile:
    #   xs_ref:  (TL, D)      input sequence chunk (u), f32
    #   xw_ref:  (D, R+2N)    fused x_proj weight [dt | B | C], bf16
    #   dtw_ref: (R, D)       dt_proj weight (transposed), f32
    #   db_ref:  (1, D)       dt_proj bias
    #   A_ref:   (N, D)       -exp(A_log) (transposed)
    #   Dp_ref:  (1, D)       skip D
    #   o_ref:   (TL, D)      scan output chunk
    # scratch: h (N,D) carried across chunks, proj (TL,R+2N), dA/dBu/H (TL,N,D)
    TL, D = xs_ref.shape
    N = A_ref.shape[0]
    R = dtw_ref.shape[0]
    k = pl.program_id(0)
    rev = k // 2                     # 0: forward scan (k=0,1), 1: reversed scan (k=2,3)

    @pl.when(pl.program_id(2) == 0)
    def _init():
        h_scr[...] = jnp.zeros_like(h_scr)

    u = xs_ref[...]                                                        # (TL, D) f32

    # fused x_proj: one bf16 MXU pass producing [dt_lowrank | B | C]
    proj_scr[...] = jnp.dot(u.astype(jnp.bfloat16), xw_ref[...],
                            preferred_element_type=jnp.float32)

    # dt_proj: rank-1 VPU FMAs when dt_rank is small (frees the MXU), matmul otherwise
    if R <= 8:
        dt = jnp.zeros((TL, D), jnp.float32)
        for r in range(R):
            dt = dt + proj_scr[:, r:r + 1] * dtw_ref[r:r + 1, :]
    else:
        dt = jnp.dot(proj_scr[:, :R].astype(jnp.bfloat16),
                     dtw_ref[...].astype(jnp.bfloat16),
                     preferred_element_type=jnp.float32)
    delta = _softplus(dt + db_ref[...])                                    # (TL, D) f32

    Bm = proj_scr[:, R:R + N]                                              # (TL, N)
    dA_scr[...] = jnp.exp(delta[:, None, :] * A_ref[...][None, :, :])      # (TL, N, D)
    dbu_scr[...] = (delta * u)[:, None, :] * Bm[:, :, None]                # (TL, N, D)

    # sequential recurrence (f32).  Hidden states are buffered so the output path
    # is batched VPU math + one dense (TL, D) store instead of per-step 1-row work.
    def body(t, h):
        tt = rev * (TL - 1 - t) + (1 - rev) * t
        h = dA_scr[tt] * h + dbu_scr[tt]
        H_scr[tt] = h
        return h

    h_scr[...] = jax.lax.fori_loop(0, TL, body, h_scr[...])

    Cm = proj_scr[:, R + N:R + 2 * N]                                      # (TL, N)
    y = jnp.sum(Cm[:, :, None] * H_scr[...], axis=1)                       # (TL, D)
    o_ref[...] = y + Dp_ref[...] * u


def out_fused_kernel(yr_ref, yc_ref, z_ref, g_ref, b_ref, w_ref, res_ref, o_ref):
    # (y_row + y_col) -> LayerNorm -> * SiLU(z) -> @ W_out^T (bf16 MXU) -> + residual
    y = yr_ref[...] + yc_ref[...]
    mu = jnp.mean(y, axis=-1, keepdims=True)
    yd = y - mu
    var = jnp.mean(yd * yd, axis=-1, keepdims=True)
    yn = yd * jax.lax.rsqrt(var + 1e-5) * g_ref[...] + b_ref[...]
    z = z_ref[...]
    gated = (yn * (z * _sigmoid(z))).astype(jnp.bfloat16)
    o_ref[...] = res_ref[...] + jnp.dot(gated, w_ref[...],
                                        preferred_element_type=jnp.float32)


# ----------------------------- pallas_call wrappers -----------------------------

def pl_ln_inproj(x2d, g, b, wx, wz, TM):
    M, C = x2d.shape
    D = wx.shape[1]
    return pl.pallas_call(
        ln_inproj_kernel,
        out_shape=(jax.ShapeDtypeStruct((M, D), jnp.float32),
                   jax.ShapeDtypeStruct((M, D), jnp.float32)),
        grid=(M // TM,),
        in_specs=[pl.BlockSpec((TM, C), lambda i: (i, 0)),
                  pl.BlockSpec((1, C), lambda i: (0, 0)),
                  pl.BlockSpec((1, C), lambda i: (0, 0)),
                  pl.BlockSpec((C, D), lambda i: (0, 0)),
                  pl.BlockSpec((C, D), lambda i: (0, 0))],
        out_specs=[pl.BlockSpec((TM, D), lambda i: (i, 0)),
                   pl.BlockSpec((TM, D), lambda i: (i, 0))],
        compiler_params=pltpu.CompilerParams(dimension_semantics=("parallel",)),
    )(x2d, g, b, wx, wz)


def pl_dwconv_silu(xpad, w9, bias):
    B, Hp, Wp, C = xpad.shape
    H, W = Hp - 2, Wp - 2
    return pl.pallas_call(
        dwconv_silu_kernel,
        out_shape=jax.ShapeDtypeStruct((B, H, W, C), jnp.float32),
        grid=(B,),
        in_specs=[pl.BlockSpec((None, Hp, Wp, C), lambda b: (b, 0, 0, 0)),
                  pl.BlockSpec((9, C), lambda b: (0, 0)),
                  pl.BlockSpec((1, C), lambda b: (0, 0))],
        out_specs=pl.BlockSpec((None, H, W, C), lambda b: (b, 0, 0, 0)),
        compiler_params=pltpu.CompilerParams(dimension_semantics=("parallel",)),
    )(xpad, w9, bias)


def pl_ss2d_core(xs, p, TL):
    # xs: (B, 2, L, D) with slot 0 = row-major sequence, slot 1 = col-major sequence.
    # output: (B, 4, L, D); k=2/3 are the reversed scans already written back in
    # forward (un-flipped) order.
    B, _, L, D = xs.shape
    N = p['d_state']
    R = p['dt_rank']
    R2N = R + 2 * N
    K = 4
    NC = L // TL

    def cc_of(k, c):                       # chunk visiting order (reversed for k>=2)
        r = k // 2
        return r * (NC - 1 - c) + (1 - r) * c

    return pl.pallas_call(
        ss2d_core_kernel,
        out_shape=jax.ShapeDtypeStruct((B, K, L, D), jnp.float32),
        grid=(K, B, NC),
        in_specs=[
            pl.BlockSpec((None, None, TL, D), lambda k, b, c: (b, k % 2, cc_of(k, c), 0)),
            pl.BlockSpec((None, D, R2N), lambda k, b, c: (k, 0, 0)),
            pl.BlockSpec((None, R, D), lambda k, b, c: (k, 0, 0)),
            pl.BlockSpec((None, 1, D), lambda k, b, c: (k, 0, 0)),
            pl.BlockSpec((None, N, D), lambda k, b, c: (k, 0, 0)),
            pl.BlockSpec((None, 1, D), lambda k, b, c: (k, 0, 0)),
        ],
        out_specs=pl.BlockSpec((None, None, TL, D),
                               lambda k, b, c: (b, k, cc_of(k, c), 0)),
        scratch_shapes=[pltpu.VMEM((N, D), jnp.float32),      # h carried across chunks
                        pltpu.VMEM((TL, R2N), jnp.float32),   # fused x_proj output
                        pltpu.VMEM((TL, N, D), jnp.float32),  # exp(delta*A)
                        pltpu.VMEM((TL, N, D), jnp.float32),  # delta*u*B
                        pltpu.VMEM((TL, N, D), jnp.float32)], # buffered hidden states
        compiler_params=pltpu.CompilerParams(
            dimension_semantics=("parallel", "parallel", "arbitrary"),
            vmem_limit_bytes=32 * 1024 * 1024),
    )(xs, p['xw_fused'], p['dtw_T'], p['dt_bias'], p['A_nd'], p['Ds'])


def pl_out_fused(y_row, y_col, z, g, b, w, resid, TM):
    M, D = y_row.shape
    C = w.shape[1]
    return pl.pallas_call(
        out_fused_kernel,
        out_shape=jax.ShapeDtypeStruct((M, C), jnp.float32),
        grid=(M // TM,),
        in_specs=[pl.BlockSpec((TM, D), lambda i: (i, 0)),
                  pl.BlockSpec((TM, D), lambda i: (i, 0)),
                  pl.BlockSpec((TM, D), lambda i: (i, 0)),
                  pl.BlockSpec((1, D), lambda i: (0, 0)),
                  pl.BlockSpec((1, D), lambda i: (0, 0)),
                  pl.BlockSpec((D, C), lambda i: (0, 0)),
                  pl.BlockSpec((TM, C), lambda i: (i, 0))],
        out_specs=pl.BlockSpec((TM, C), lambda i: (i, 0)),
        compiler_params=pltpu.CompilerParams(dimension_semantics=("parallel",)),
    )(y_row, y_col, z, g, b, w, resid)


# ----------------------------- VSSBlock / VSSMBLOCK forward (JAX glue) -----------------------------

def vss_block_forward(x, p):
    # x: (B, H, W, C) f32
    B, H, W, C = x.shape
    D = p['d_inner']
    L = H * W
    M = B * L
    TM = _pick_tile(M)

    resid = x.reshape(M, C)
    xpart, z = pl_ln_inproj(resid, p['ln1_g'], p['ln1_b'],
                            p['in_wx'], p['in_wz'], TM)          # ln_1 + in_proj fused

    xc = xpart.reshape(B, H, W, D)
    # TODO(synk): fold the 1-pixel halo into the conv kernel with masked edge taps to
    # save this extra HBM pad pass (and pad d_inner to 128 lanes at tiny widths).
    xpad = jnp.pad(xc, ((0, 0), (1, 1), (1, 1), (0, 0)))
    xconv = pl_dwconv_silu(xpad, p['conv_w9'], p['conv_b'])      # (B, H, W, D)

    # only the two base traversal orders are materialized; the reversed scans
    # (directions 2 & 3) are done in-kernel by iterating chunks/time backwards.
    dir0 = xconv.reshape(B, L, D)                                # row-major (h*W + w)
    dir1 = jnp.transpose(xconv, (0, 2, 1, 3)).reshape(B, L, D)   # col-major (w*H + h)
    xs = jnp.stack([dir0, dir1], axis=1)                         # (B, 2, L, D)

    TL = _choose_tl(L)
    out_core = pl_ss2d_core(xs, p, TL)                           # (B, 4, L, D)

    y_row = out_core[:, 0] + out_core[:, 2]                      # row-major positions
    y_col = out_core[:, 1] + out_core[:, 3]                      # col-major positions
    y_col = jnp.transpose(y_col.reshape(B, W, H, D), (0, 2, 1, 3)).reshape(B, L, D)

    out = pl_out_fused(y_row.reshape(M, D), y_col.reshape(M, D), z,
                       p['out_norm_g'], p['out_norm_b'],
                       p['out_proj_wT'], resid, TM)              # merge+LN+gate+proj+res
    return out.reshape(B, H, W, C)


def vssm_block_forward(x, params_list):
    # DropPath / Dropout are identity at inference and are omitted.
    for p in params_list:
        x = vss_block_forward(x, p)
    return x


# ----------------------------- deterministic parameter init -----------------------------

def init_block_params(key, d_model, d_state=16, expand=2):
    d_inner = int(expand * d_model)
    dt_rank = math.ceil(d_model / 16)
    K = 4
    keys = jax.random.split(key, 8)
    p = {'d_inner': d_inner, 'dt_rank': dt_rank, 'd_state': d_state}

    p['ln1_g'] = jnp.ones((1, d_model), jnp.float32)
    p['ln1_b'] = jnp.zeros((1, d_model), jnp.float32)

    w_in = jax.random.uniform(keys[0], (2 * d_inner, d_model), jnp.float32,
                              -1.0, 1.0) / math.sqrt(d_model)
    p['in_wx'] = w_in[:d_inner].T.astype(jnp.bfloat16)           # (C, D)
    p['in_wz'] = w_in[d_inner:].T.astype(jnp.bfloat16)           # (C, D)

    wc = jax.random.uniform(keys[1], (d_inner, 1, 3, 3), jnp.float32, -1.0, 1.0) / 3.0
    p['conv_w9'] = jnp.transpose(wc[:, 0], (1, 2, 0)).reshape(9, d_inner)
    p['conv_b'] = jax.random.uniform(keys[2], (1, d_inner), jnp.float32, -1.0, 1.0) / 3.0

    wx = jax.random.uniform(keys[3], (K, dt_rank + 2 * d_state, d_inner),
                            jnp.float32, -1.0, 1.0) / math.sqrt(d_inner)
    # fused x_proj weight, output columns ordered [dt | B | C]
    p['xw_fused'] = jnp.transpose(wx, (0, 2, 1)).astype(jnp.bfloat16)  # (K, D, R+2N)

    dt_std = dt_rank ** -0.5
    wdt = jax.random.uniform(keys[4], (K, d_inner, dt_rank), jnp.float32,
                             -dt_std, dt_std)
    p['dtw_T'] = jnp.transpose(wdt, (0, 2, 1))                   # (K, R, D) f32 (VPU path)

    dt = jnp.exp(jax.random.uniform(keys[5], (K, d_inner), jnp.float32)
                 * (math.log(0.1) - math.log(0.001)) + math.log(0.001))
    dt = jnp.maximum(dt, 1e-4)
    inv_dt = dt + jnp.log(-jnp.expm1(-dt))
    p['dt_bias'] = inv_dt.reshape(K, 1, d_inner)                 # (K, 1, D)

    # A_log = log(arange(1..N));  A = -exp(A_log) = -(1..N)
    A = jnp.tile(jnp.arange(1, d_state + 1, dtype=jnp.float32)[None, None, :],
                 (K, d_inner, 1))                                # (K, D, N)
    p['A_nd'] = jnp.transpose(-A, (0, 2, 1))                     # (K, N, D)
    p['Ds'] = jnp.ones((K, 1, d_inner), jnp.float32)             # (K, 1, D)

    p['out_norm_g'] = jnp.ones((1, d_inner), jnp.float32)
    p['out_norm_b'] = jnp.zeros((1, d_inner), jnp.float32)
    w_out = jax.random.uniform(keys[6], (d_model, d_inner), jnp.float32,
                               -1.0, 1.0) / math.sqrt(d_inner)
    p['out_proj_wT'] = w_out.T.astype(jnp.bfloat16)              # (D, C)
    return p


# ----------------------------- main -----------------------------

if __name__ == "__main__":
    # small shapes consistent with the module: B=2, H=W=8, d_model=32
    # (d_inner=64, d_state=16, dt_rank=2, L=64 -> TL=32, two scan chunks), depth=2.
    B, H, W, d_model = 2, 8, 8, 32
    d_state = 16
    depth = 2

    key = jax.random.PRNGKey(0)
    kx, kp = jax.random.split(key)
    x = jax.random.normal(kx, (B, H, W, d_model), jnp.float32)

    params = []
    for _ in range(depth):
        kp, kb = jax.random.split(kp)
        params.append(init_block_params(kb, d_model, d_state=d_state))

    out = vssm_block_forward(x, params)
    out = jax.block_until_ready(out)

    assert out.shape == (B, H, W, d_model)
    assert bool(jnp.all(jnp.isfinite(out)))
    print("KERNEL_OK")
</pallas_src>

<mosaic_0001>
module attributes {stable_mosaic.version = 11 : i64} {
  func.func @ln_inproj_kernel(%arg0: i32, %arg1: memref<128x32xf32, #tpu.memory_space<vmem>>, %arg2: memref<1x32xf32, #tpu.memory_space<vmem>>, %arg3: memref<1x32xf32, #tpu.memory_space<vmem>>, %arg4: memref<32x64xbf16, #tpu.memory_space<vmem>>, %arg5: memref<32x64xbf16, #tpu.memory_space<vmem>>, %arg6: memref<128x64xf32, #tpu.memory_space<vmem>>, %arg7: memref<128x64xf32, #tpu.memory_space<vmem>>) attributes {dimension_semantics = [#tpu.dimension_semantics<parallel>], iteration_bounds = array<i64: 1>, scalar_prefetch = 0 : i64, scratch_operands = 0 : i64, tpu.core_type = #tpu.core_type<tc>, window_params = [{transform_indices = @transform_0, window_bounds = array<i64: 128, 32>}, {pipeline_mode = #tpu.pipeline_mode<synchronous>, transform_indices = @transform_1, window_bounds = array<i64: 1, 32>}, {pipeline_mode = #tpu.pipeline_mode<synchronous>, transform_indices = @transform_2, window_bounds = array<i64: 1, 32>}, {pipeline_mode = #tpu.pipeline_mode<synchronous>, transform_indices = @transform_3, window_bounds = array<i64: 32, 64>}, {pipeline_mode = #tpu.pipeline_mode<synchronous>, transform_indices = @transform_4, window_bounds = array<i64: 32, 64>}, {transform_indices = @transform_5, window_bounds = array<i64: 128, 64>}, {transform_indices = @transform_6, window_bounds = array<i64: 128, 64>}]} {
    %c0 = arith.constant 0 : index
    %c0_0 = arith.constant 0 : index
    %0 = vector.load %arg1[%c0, %c0_0] : memref<128x32xf32, #tpu.memory_space<vmem>>, vector<128x32xf32>
    %cst = arith.constant dense<0.000000e+00> : vector<128xf32>
    %1 = vector.multi_reduction <add>, %0, %cst [1] : vector<128x32xf32> to vector<128xf32>
    %2 = vector.shape_cast %1 : vector<128xf32> to vector<128x1xf32>
    %cst_1 = arith.constant 3.200000e+01 : f32
    %3 = vector.broadcast %cst_1 : f32 to vector<128x1xf32>
    %4 = arith.divf %2, %3 : vector<128x1xf32>
    %5 = vector.broadcast %4 : vector<128x1xf32> to vector<128x32xf32>
    %6 = arith.subf %0, %5 : vector<128x32xf32>
    %7 = arith.mulf %6, %6 : vector<128x32xf32>
    %cst_2 = arith.constant dense<0.000000e+00> : vector<128xf32>
    %8 = vector.multi_reduction <add>, %7, %cst_2 [1] : vector<128x32xf32> to vector<128xf32>
    %9 = vector.shape_cast %8 : vector<128xf32> to vector<128x1xf32>
    %cst_3 = arith.constant 3.200000e+01 : f32
    %10 = vector.broadcast %cst_3 : f32 to vector<128x1xf32>
    %11 = arith.divf %9, %10 : vector<128x1xf32>
    %cst_4 = arith.constant 9.99999974E-6 : f32
    %12 = vector.broadcast %cst_4 : f32 to vector<128x1xf32>
    %13 = arith.addf %11, %12 : vector<128x1xf32>
    %14 = math.rsqrt %13 : vector<128x1xf32>
    %15 = vector.broadcast %14 : vector<128x1xf32> to vector<128x32xf32>
    %16 = arith.mulf %6, %15 : vector<128x32xf32>
    %c0_5 = arith.constant 0 : index
    %c0_6 = arith.constant 0 : index
    %17 = vector.load %arg2[%c0_5, %c0_6] : memref<1x32xf32, #tpu.memory_space<vmem>>, vector<1x32xf32>
    %18 = vector.broadcast %17 : vector<1x32xf32> to vector<128x32xf32>
    %19 = arith.mulf %16, %18 : vector<128x32xf32>
    %c0_7 = arith.constant 0 : index
    %c0_8 = arith.constant 0 : index
    %20 = vector.load %arg3[%c0_7, %c0_8] : memref<1x32xf32, #tpu.memory_space<vmem>>, vector<1x32xf32>
    %21 = vector.broadcast %20 : vector<1x32xf32> to vector<128x32xf32>
    %22 = arith.addf %19, %21 : vector<128x32xf32>
    %23 = arith.truncf %22 : vector<128x32xf32> to vector<128x32xbf16>
    %c0_9 = arith.constant 0 : index
    %c0_10 = arith.constant 0 : index
    %24 = vector.load %arg4[%c0_9, %c0_10] : memref<32x64xbf16, #tpu.memory_space<vmem>>, vector<32x64xbf16>
    %cst_11 = arith.constant dense<0.000000e+00> : vector<128x64xf32>
    %25 = tpu.matmul %23, %24, %cst_11 {dimension_numbers = #tpu.dot_dimension_numbers<[1], [0], [0], [1], [0, 0, 1, 1], [], []>} : vector<128x32xbf16>, vector<32x64xbf16>, vector<128x64xf32> -> vector<128x64xf32>
    %c0_12 = arith.constant 0 : index
    %c0_13 = arith.constant 0 : index
    %26 = vector.load %arg6[%c0_12, %c0_13] : memref<128x64xf32, #tpu.memory_space<vmem>>, vector<128x64xf32>
    tpu.vector_store %arg6[%c0_12, %c0_13], %25 {strides = array<i32>} : memref<128x64xf32, #tpu.memory_space<vmem>>, vector<128x64xf32>,
    %c0_14 = arith.constant 0 : index
    %c0_15 = arith.constant 0 : index
    %27 = vector.load %arg5[%c0_14, %c0_15] : memref<32x64xbf16, #tpu.memory_space<vmem>>, vector<32x64xbf16>
    %cst_16 = arith.constant dense<0.000000e+00> : vector<128x64xf32>
    %28 = tpu.matmul %23, %27, %cst_16 {dimension_numbers = #tpu.dot_dimension_numbers<[1], [0], [0], [1], [0, 0, 1, 1], [], []>} : vector<128x32xbf16>, vector<32x64xbf16>, vector<128x64xf32> -> vector<128x64xf32>
    %c0_17 = arith.constant 0 : index
    %c0_18 = arith.constant 0 : index
    %29 = vector.load %arg7[%c0_17, %c0_18] : memref<128x64xf32, #tpu.memory_space<vmem>>, vector<128x64xf32>
    tpu.vector_store %arg7[%c0_17, %c0_18], %28 {strides = array<i32>} : memref<128x64xf32, #tpu.memory_space<vmem>>, vector<128x64xf32>,
    return
  }
  func.func @transform_0(%arg0: i32) -> (i32, i32) {
    %c0_i32 = arith.constant 0 : i32
    %c0_i32_0 = arith.constant 0 : i32
    return %arg0, %c0_i32 : i32, i32
  }
  func.func @transform_1(%arg0: i32) -> (i32, i32) {
    %c0_i32 = arith.constant 0 : i32
    %c0_i32_0 = arith.constant 0 : i32
    %c0_i32_1 = arith.constant 0 : i32
    return %c0_i32, %c0_i32_0 : i32, i32
  }
  func.func @transform_2(%arg0: i32) -> (i32, i32) {
    %c0_i32 = arith.constant 0 : i32
    %c0_i32_0 = arith.constant 0 : i32
    %c0_i32_1 = arith.constant 0 : i32
    return %c0_i32, %c0_i32_0 : i32, i32
  }
  func.func @transform_3(%arg0: i32) -> (i32, i32) {
    %c0_i32 = arith.constant 0 : i32
    %c0_i32_0 = arith.constant 0 : i32
    %c0_i32_1 = arith.constant 0 : i32
    return %c0_i32, %c0_i32_0 : i32, i32
  }
  func.func @transform_4(%arg0: i32) -> (i32, i32) {
    %c0_i32 = arith.constant 0 : i32
    %c0_i32_0 = arith.constant 0 : i32
    %c0_i32_1 = arith.constant 0 : i32
    return %c0_i32, %c0_i32_0 : i32, i32
  }
  func.func @transform_5(%arg0: i32) -> (i32, i32) {
    %c0_i32 = arith.constant 0 : i32
    %c0_i32_0 = arith.constant 0 : i32
    return %arg0, %c0_i32 : i32, i32
  }
  func.func @transform_6(%arg0: i32) -> (i32, i32) {
    %c0_i32 = arith.constant 0 : i32
    %c0_i32_0 = arith.constant 0 : i32
    return %arg0, %c0_i32 : i32, i32
  }
}

</mosaic_0001>

<llo_original>
// kernel: tpu_custom_call.1
$region0: #{tpu_custom_call.1}
  #allocation0 [shape = 'u32[]', space=smem, size = 0x4, offset = 0x4, fixed_abs, tag = 'smem constant byte address 0x4 - core index']
  #allocation1 [shape = 'u32[144,128]{1,0:T(1,128)}', space=vmem, size = 0x12000, scoped, tag = 'internal scratch']
  %s0 = inlined_call_operand.vmem [shape: f32[128,32], index: 0, kind: input, shape index: {}]
  %s1 = inlined_call_operand.vmem [shape: f32[1,32], index: 1, kind: input, shape index: {}]
  %s2 = inlined_call_operand.vmem [shape: f32[1,32], index: 2, kind: input, shape index: {}]
  %s3 = inlined_call_operand.vmem [shape: bf16[32,64], index: 3, kind: input, shape index: {}]
  %s4 = inlined_call_operand.vmem [shape: bf16[32,64], index: 4, kind: input, shape index: {}]
  %s5 = inlined_call_operand.vmem [shape: f32[128,64], index: 5, kind: output, shape index: {0}]
  %s6 = inlined_call_operand.vmem [shape: f32[128,64], index: 6, kind: output, shape index: {1}]
  %7 = xla_tuple %s5, %s6
  %s8 = sld [smem:[#allocation0]]
  $region38: #{tpu_custom_call.1} parent=0
    _
  %s10 = ssub.s32 1, %s8
  %s11 = scalar_select 0, %s10, %s8
  // Predicated region
  $region2: #{tpu_custom_call.1} parent=0 // pred_check
    _
  $region3: #{tpu_custom_call.1} parent=0 // pred_check_branch
    %13 = sbr.rel (0) target = $region5
  $region4: #{tpu_custom_call.1} parent=0 // pred_region
    _
  $region5: #{tpu_custom_call.1} parent=0 // pred_fallthru
    _
  // Predicated region
  $region6: #{tpu_custom_call.1} parent=0 // pred_check
    _
  $region7: #{tpu_custom_call.1} parent=0 // pred_check_branch
    %15 = sbr.rel (0) target = $region9
  $region8: #{tpu_custom_call.1} parent=0 // pred_region
    _
  $region9: #{tpu_custom_call.1} parent=0 // pred_fallthru
    _
  // Predicated region
  $region10: #{tpu_custom_call.1} parent=0 // pred_check
    _
  $region11: #{tpu_custom_call.1} parent=0 // pred_check_branch
    %17 = sbr.rel (0) target = $region13
  $region12: #{tpu_custom_call.1} parent=0 // pred_region
    _
  $region13: #{tpu_custom_call.1} parent=0 // pred_fallthru
    _
  // Predicated region
  $region14: #{tpu_custom_call.1} parent=0 // pred_check
    _
  $region15: #{tpu_custom_call.1} parent=0 // pred_check_branch
    %19 = sbr.rel (0) target = $region17
  $region16: #{tpu_custom_call.1} parent=0 // pred_region
    _
  $region17: #{tpu_custom_call.1} parent=0 // pred_fallthru
    _
  // Predicated region
  $region18: #{tpu_custom_call.1} parent=0 // pred_check
    _
  $region19: #{tpu_custom_call.1} parent=0 // pred_check_branch
    %21 = sbr.rel (0) target = $region21
  $region20: #{tpu_custom_call.1} parent=0 // pred_region
    _
  $region21: #{tpu_custom_call.1} parent=0 // pred_fallthru
    _
  %v23 = vld [vmem:[%s0] sm:$0xff]
  %v24 = vld [vmem:[%s0 + $0x8] sm:$0xff]
  %v25 = vld [vmem:[%s0 + $0x10] sm:$0xff]
  %v26 = vld [vmem:[%s0 + $0x18] sm:$0xff]
  %v27 = vld [vmem:[%s0 + $0x20] sm:$0xff]
  %v28 = vld [vmem:[%s0 + $0x28] sm:$0xff]
  %v29 = vld [vmem:[%s0 + $0x30] sm:$0xff]
  %v30 = vld [vmem:[%s0 + $0x38] sm:$0xff]
  %v31 = vld [vmem:[%s0 + $0x40] sm:$0xff]
  %v32 = vld [vmem:[%s0 + $0x48] sm:$0xff]
  %v33 = vld [vmem:[%s0 + $0x50] sm:$0xff]
  %v34 = vld [vmem:[%s0 + $0x58] sm:$0xff]
  %v35 = vld [vmem:[%s0 + $0x60] sm:$0xff]
  %v36 = vld [vmem:[%s0 + $0x68] sm:$0xff]
  %v37 = vld [vmem:[%s0 + $0x70] sm:$0xff]
  %v38 = vld [vmem:[%s0 + $0x78] sm:$0xff]
  %vm39 = vcmask 261120
  %v40 = vsel %vm39, %v23, 0.0
  %41 = vadd.xlane.f32.xlu0 %v40
  %v42 = vpop.xlane.xlu0 %41
  %v43 = vsel %vm39, %v24, 0.0
  %44 = vadd.xlane.f32.xlu0 %v43
  %v45 = vpop.xlane.xlu0 %44
  %v46 = vsel %vm39, %v25, 0.0
  %47 = vadd.xlane.f32.xlu0 %v46
  %v48 = vpop.xlane.xlu0 %47
  %v49 = vsel %vm39, %v26, 0.0
  %50 = vadd.xlane.f32.xlu0 %v49
  %v51 = vpop.xlane.xlu0 %50
  %v52 = vsel %vm39, %v27, 0.0
  %53 = vadd.xlane.f32.xlu0 %v52
  %v54 = vpop.xlane.xlu0 %53
  %v55 = vsel %vm39, %v28, 0.0
  %56 = vadd.xlane.f32.xlu0 %v55
  %v57 = vpop.xlane.xlu0 %56
  %v58 = vsel %vm39, %v29, 0.0
  %59 = vadd.xlane.f32.xlu0 %v58
  %v60 = vpop.xlane.xlu0 %59
  %v61 = vsel %vm39, %v30, 0.0
  %62 = vadd.xlane.f32.xlu0 %v61
  %v63 = vpop.xlane.xlu0 %62
  %v64 = vsel %vm39, %v31, 0.0
  %65 = vadd.xlane.f32.xlu0 %v64
  %v66 = vpop.xlane.xlu0 %65
  %v67 = vsel %vm39, %v32, 0.0
  %68 = vadd.xlane.f32.xlu0 %v67
  %v69 = vpop.xlane.xlu0 %68
  %v70 = vsel %vm39, %v33, 0.0
  %71 = vadd.xlane.f32.xlu0 %v70
  %v72 = vpop.xlane.xlu0 %71
  %v73 = vsel %vm39, %v34, 0.0
  %74 = vadd.xlane.f32.xlu0 %v73
  %v75 = vpop.xlane.xlu0 %74
  %v76 = vsel %vm39, %v35, 0.0
  %77 = vadd.xlane.f32.xlu0 %v76
  %v78 = vpop.xlane.xlu0 %77
  %v79 = vsel %vm39, %v36, 0.0
  %80 = vadd.xlane.f32.xlu0 %v79
  %v81 = vpop.xlane.xlu0 %80
  %v82 = vsel %vm39, %v37, 0.0
  %83 = vadd.xlane.f32.xlu0 %v82
  %v84 = vpop.xlane.xlu0 %83
  %v85 = vsel %vm39, %v38, 0.0
  %86 = vadd.xlane.f32.xlu0 %v85
  %v87 = vpop.xlane.xlu0 %86
  %v88 = vrcp.pop 32.0
  %v89 = vmul.f32 %v42, %v88
  %v90 = vmul.f32 %v45, %v88
  %v91 = vmul.f32 %v48, %v88
  %v92 = vmul.f32 %v51, %v88
  %v93 = vmul.f32 %v54, %v88
  %v94 = vmul.f32 %v57, %v88
  %v95 = vmul.f32 %v60, %v88
  %v96 = vmul.f32 %v63, %v88
  %v97 = vmul.f32 %v66, %v88
  %v98 = vmul.f32 %v69, %v88
  %v99 = vmul.f32 %v72, %v88
  %v100 = vmul.f32 %v75, %v88
  %v101 = vmul.f32 %v78, %v88
  %v102 = vmul.f32 %v81, %v88
  %v103 = vmul.f32 %v84, %v88
  %v104 = vmul.f32 %v87, %v88
  %v105 = vsub.f32 %v23, %v89
  %v106 = vsub.f32 %v24, %v90
  %v107 = vsub.f32 %v25, %v91
  %v108 = vsub.f32 %v26, %v92
  %v109 = vsub.f32 %v27, %v93
  %v110 = vsub.f32 %v28, %v94
  %v111 = vsub.f32 %v29, %v95
  %v112 = vsub.f32 %v30, %v96
  %v113 = vsub.f32 %v31, %v97
  %v114 = vsub.f32 %v32, %v98
  %v115 = vsub.f32 %v33, %v99
  %v116 = vsub.f32 %v34, %v100
  %v117 = vsub.f32 %v35, %v101
  %v118 = vsub.f32 %v36, %v102
  %v119 = vsub.f32 %v37, %v103
  %v120 = vsub.f32 %v38, %v104
  %v121 = vmul.f32 %v105, %v105
  %v122 = vmul.f32 %v106, %v106
  %v123 = vmul.f32 %v107, %v107
  %v124 = vmul.f32 %v108, %v108
  %v125 = vmul.f32 %v109, %v109
  %v126 = vmul.f32 %v110, %v110
  %v127 = vmul.f32 %v111, %v111
  %v128 = vmul.f32 %v112, %v112
  %v129 = vmul.f32 %v113, %v113
  %v130 = vmul.f32 %v114, %v114
  %v131 = vmul.f32 %v115, %v115
  %v132 = vmul.f32 %v116, %v116
  %v133 = vmul.f32 %v117, %v117
  %v134 = vmul.f32 %v118, %v118
  %v135 = vmul.f32 %v119, %v119
  %v136 = vmul.f32 %v120, %v120
  %v137 = vsel %vm39, %v121, 0.0
  %138 = vadd.xlane.f32.xlu0 %v137
  %v139 = vpop.xlane.xlu0 %138
  %v140 = vsel %vm39, %v122, 0.0
  %141 = vadd.xlane.f32.xlu0 %v140
  %v142 = vpop.xlane.xlu0 %141
  %v143 = vsel %vm39, %v123, 0.0
  %144 = vadd.xlane.f32.xlu0 %v143
  %v145 = vpop.xlane.xlu0 %144
  %v146 = vsel %vm39, %v124, 0.0
  %147 = vadd.xlane.f32.xlu0 %v146
  %v148 = vpop.xlane.xlu0 %147
  %v149 = vsel %vm39, %v125, 0.0
  %150 = vadd.xlane.f32.xlu0 %v149
  %v151 = vpop.xlane.xlu0 %150
  %v152 = vsel %vm39, %v126, 0.0
  %153 = vadd.xlane.f32.xlu0 %v152
  %v154 = vpop.xlane.xlu0 %153
  %v155 = vsel %vm39, %v127, 0.0
  %156 = vadd.xlane.f32.xlu0 %v155
  %v157 = vpop.xlane.xlu0 %156
  %v158 = vsel %vm39, %v128, 0.0
  %159 = vadd.xlane.f32.xlu0 %v158
  %v160 = vpop.xlane.xlu0 %159
  %v161 = vsel %vm39, %v129, 0.0
  %162 = vadd.xlane.f32.xlu0 %v161
  %v163 = vpop.xlane.xlu0 %162
  %v164 = vsel %vm39, %v130, 0.0
  %165 = vadd.xlane.f32.xlu0 %v164
  %v166 = vpop.xlane.xlu0 %165
  %v167 = vsel %vm39, %v131, 0.0
  %168 = vadd.xlane.f32.xlu0 %v167
  %v169 = vpop.xlane.xlu0 %168
  %v170 = vsel %vm39, %v132, 0.0
  %171 = vadd.xlane.f32.xlu0 %v170
  %v172 = vpop.xlane.xlu0 %171
  %v173 = vsel %vm39, %v133, 0.0
  %174 = vadd.xlane.f32.xlu0 %v173
  %v175 = vpop.xlane.xlu0 %174
  %v176 = vsel %vm39, %v134, 0.0
  %177 = vadd.xlane.f32.xlu0 %v176
  %v178 = vpop.xlane.xlu0 %177
  %v179 = vsel %vm39, %v135, 0.0
  %180 = vadd.xlane.f32.xlu0 %v179
  %v181 = vpop.xlane.xlu0 %180
  %v182 = vsel %vm39, %v136, 0.0
  %183 = vadd.xlane.f32.xlu0 %v182
  %v184 = vpop.xlane.xlu0 %183
  %v185 = vmul.f32 %v139, %v88
  %v186 = vmul.f32 %v142, %v88
  %v187 = vmul.f32 %v145, %v88
  %v188 = vmul.f32 %v148, %v88
  %v189 = vmul.f32 %v151, %v88
  %v190 = vmul.f32 %v154, %v88
  %v191 = vmul.f32 %v157, %v88
  %v192 = vmul.f32 %v160, %v88
  %v193 = vmul.f32 %v163, %v88
  %v194 = vmul.f32 %v166, %v88
  %v195 = vmul.f32 %v169, %v88
  %v196 = vmul.f32 %v172, %v88
  %v197 = vmul.f32 %v175, %v88
  %v198 = vmul.f32 %v178, %v88
  %v199 = vmul.f32 %v181, %v88
  %v200 = vmul.f32 %v184, %v88
  %v201 = vadd.f32 %v185, 1e-05
  %v202 = vadd.f32 %v186, 1e-05
  %v203 = vadd.f32 %v187, 1e-05
  %v204 = vadd.f32 %v188, 1e-05
  %v205 = vadd.f32 %v189, 1e-05
  %v206 = vadd.f32 %v190, 1e-05
  %v207 = vadd.f32 %v191, 1e-05
  %v208 = vadd.f32 %v192, 1e-05
  %v209 = vadd.f32 %v193, 1e-05
  %v210 = vadd.f32 %v194, 1e-05
  %v211 = vadd.f32 %v195, 1e-05
  %v212 = vadd.f32 %v196, 1e-05
  %v213 = vadd.f32 %v197, 1e-05
  %v214 = vadd.f32 %v198, 1e-05
  %v215 = vadd.f32 %v199, 1e-05
  %v216 = vadd.f32 %v200, 1e-05
  %v217 = vrsqrt.pop %v201
  %v218 = vrsqrt.pop %v202
  %v219 = vrsqrt.pop %v203
  %v220 = vrsqrt.pop %v204
  %v221 = vrsqrt.pop %v205
  %v222 = vrsqrt.pop %v206
  %v223 = vrsqrt.pop %v207
  %v224 = vrsqrt.pop %v208
  %v225 = vrsqrt.pop %v209
  %v226 = vrsqrt.pop %v210
  %v227 = vrsqrt.pop %v211
  %v228 = vrsqrt.pop %v212
  %v229 = vrsqrt.pop %v213
  %v230 = vrsqrt.pop %v214
  %v231 = vrsqrt.pop %v215
  %v232 = vrsqrt.pop %v216
  %v233 = vmul.f32 %v105, %v217
  %v234 = vmul.f32 %v106, %v218
  %v235 = vmul.f32 %v107, %v219
  %v236 = vmul.f32 %v108, %v220
  %v237 = vmul.f32 %v109, %v221
  %v238 = vmul.f32 %v110, %v222
  %v239 = vmul.f32 %v111, %v223
  %v240 = vmul.f32 %v112, %v224
  %v241 = vmul.f32 %v113, %v225
  %v242 = vmul.f32 %v114, %v226
  %v243 = vmul.f32 %v115, %v227
  %v244 = vmul.f32 %v116, %v228
  %v245 = vmul.f32 %v117, %v229
  %v246 = vmul.f32 %v118, %v230
  %v247 = vmul.f32 %v119, %v231
  %v248 = vmul.f32 %v120, %v232
  %v249 = vld [vmem:[%s1] sm:$0x1]
  %v251 = vlaneseq
  %v252 = vshrl.u32 %v251, 7
  %v253 = vsub.s32 0, %v252
  %v254 = vrot.slane %v249, %v253
  %v256 = vmul.f32 %v233, %v254
  %v257 = vmul.f32 %v234, %v254
  %v258 = vmul.f32 %v235, %v254
  %v259 = vmul.f32 %v236, %v254
  %v260 = vmul.f32 %v237, %v254
  %v261 = vmul.f32 %v238, %v254
  %v262 = vmul.f32 %v239, %v254
  %v263 = vmul.f32 %v240, %v254
  %v264 = vmul.f32 %v241, %v254
  %v265 = vmul.f32 %v242, %v254
  %v266 = vmul.f32 %v243, %v254
  %v267 = vmul.f32 %v244, %v254
  %v268 = vmul.f32 %v245, %v254
  %v269 = vmul.f32 %v246, %v254
  %v270 = vmul.f32 %v247, %v254
  %v271 = vmul.f32 %v248, %v254
  %v272 = vld [vmem:[%s2] sm:$0x1]
  %v274 = vlaneseq
  %v275 = vshrl.u32 %v274, 7
  %v276 = vsub.s32 0, %v275
  %v277 = vrot.slane %v272, %v276
  %v279 = vadd.f32 %v256, %v277
  %v280 = vadd.f32 %v257, %v277
  %v281 = vadd.f32 %v258, %v277
  %v282 = vadd.f32 %v259, %v277
  %v283 = vadd.f32 %v260, %v277
  %v284 = vadd.f32 %v261, %v277
  %v285 = vadd.f32 %v262, %v277
  %v286 = vadd.f32 %v263, %v277
  %v287 = vadd.f32 %v264, %v277
  %v288 = vadd.f32 %v265, %v277
  %v289 = vadd.f32 %v266, %v277
  %v290 = vadd.f32 %v267, %v277
  %v291 = vadd.f32 %v268, %v277
  %v292 = vadd.f32 %v269, %v277
  %v293 = vadd.f32 %v270, %v277
  %v294 = vadd.f32 %v271, %v277
  %v295 = vpack.c.bf16 %v280, %v279
  %v296 = vpack.c.bf16 %v282, %v281
  %v297 = vpack.c.bf16 %v284, %v283
  %v298 = vpack.c.bf16 %v286, %v285
  %v299 = vpack.c.bf16 %v288, %v287
  %v300 = vpack.c.bf16 %v290, %v289
  %v301 = vpack.c.bf16 %v292, %v291
  %v302 = vpack.c.bf16 %v294, %v293
  %v303 = vld [vmem:[%s3] sm:$0xf]
  %v304 = vld [vmem:[%s3 + $0x4] sm:$0xf]
  %v305 = vld [vmem:[%s3 + $0x8] sm:$0xf]
  %v306 = vld [vmem:[%s3 + $0xc] sm:$0xf]
  %v311 = vunpack.c.l.b16 %v303
  %v312 = vunpack.c.l.b16 %v304
  %v313 = vunpack.c.l.b16 %v305
  %v314 = vunpack.c.l.b16 %v306
  %v315 = vpack.c.b16 %v312, %v311
  %v316 = vpack.c.b16 %v314, %v313
  %v320 = vsel %vm39, %v295, 0
  %v323 = vsel %vm39, %v296, 0
  %v326 = vsel %vm39, %v297, 0
  %v329 = vsel %vm39, %v298, 0
  %v332 = vsel %vm39, %v299, 0
  %v335 = vsel %vm39, %v300, 0
  %v338 = vsel %vm39, %v301, 0
  %v341 = vsel %vm39, %v302, 0
  %343 = vmatprep.subr.bf16.mxu0 0
  %344 = vmatpush1.bf16.msra.mxu0 %v315
  %345 = vmatprep.subr.bf16.mxu0 0
  %346 = vmatpush1.bf16.msra.mxu0 %v316
  %347 = vmatprep.subr.bf16.mxu0 0
  %348 = vmatpush1.bf16.msra.mxu0 0
  %349 = vmatprep.subr.bf16.mxu0 0
  %350 = vmatpush1.bf16.msra.mxu0 0
  %351 = vmatprep.subr.bf16.mxu0 0
  %352 = vmatpush1.bf16.msra.mxu0 0
  %353 = vmatprep.subr.bf16.mxu0 0
  %354 = vmatpush1.bf16.msra.mxu0 0
  %355 = vmatprep.subr.bf16.mxu0 0
  %356 = vmatpush1.bf16.msra.mxu0 0
  %357 = vmatprep.subr.bf16.mxu0 0
  %358 = vmatpush1.bf16.msra.mxu0 0
  %359 = vmatprep.subr.bf16.mxu0 0
  %360 = vmatpush1.bf16.msra.mxu0 0
  %361 = vmatprep.subr.bf16.mxu0 0
  %362 = vmatpush1.bf16.msra.mxu0 0
  %363 = vmatprep.subr.bf16.mxu0 0
  %364 = vmatpush1.bf16.msra.mxu0 0
  %365 = vmatprep.subr.bf16.mxu0 0
  %366 = vmatpush1.bf16.msra.mxu0 0
  %367 = vmatprep.subr.bf16.mxu0 0
  %368 = vmatpush1.bf16.msra.mxu0 0
  %369 = vmatprep.subr.bf16.mxu0 0
  %370 = vmatpush1.bf16.msra.mxu0 0
  %371 = vmatprep.subr.bf16.mxu0 0
  %372 = vmatpush1.bf16.msra.mxu0 0
  %373 = vmatprep.subr.bf16.mxu0 0
  %374 = vmatpush1.bf16.msra.mxu0 0
  %375 = vmatprep.mubr.bf16.mxu0 0
  %376 = vmatmul.mubr.bf16.gmra.mrb[0].mxu0 %v320
  %v377 = vpop.f32.mrb[0].mxu0
  %v378 = vadd.f32 0.0, %v377
  %v379 = vpop.f32.mrb[0].mxu0
  %v380 = vpop.f32.mrb[0].mxu0
  %v381 = vadd.f32 0.0, %v380
  %v382 = vpop.f32.mrb[0].mxu0
  %383 = vmatprep.mubr.bf16.mxu0 0
  %384 = vmatmul.mubr.bf16.gmra.mrb[0].mxu0 %v323
  %v385 = vpop.f32.mrb[0].mxu0
  %v386 = vadd.f32 0.0, %v385
  %v387 = vpop.f32.mrb[0].mxu0
  %v388 = vpop.f32.mrb[0].mxu0
  %v389 = vadd.f32 0.0, %v388
  %v390 = vpop.f32.mrb[0].mxu0
  %391 = vmatprep.mubr.bf16.mxu0 0
  %392 = vmatmul.mubr.bf16.gmra.mrb[0].mxu0 %v326
  %v393 = vpop.f32.mrb[0].mxu0
  %v394 = vadd.f32 0.0, %v393
  %v395 = vpop.f32.mrb[0].mxu0
  %v396 = vpop.f32.mrb[0].mxu0
  %v397 = vadd.f32 0.0, %v396
  %v398 = vpop.f32.mrb[0].mxu0
  %399 = vmatprep.mubr.bf16.mxu0 0
  %400 = vmatmul.mubr.bf16.gmra.mrb[0].mxu0 %v329
  %v401 = vpop.f32.mrb[0].mxu0
  %v402 = vadd.f32 0.0, %v401
  %v403 = vpop.f32.mrb[0].mxu0
  %v404 = vpop.f32.mrb[0].mxu0
  %v405 = vadd.f32 0.0, %v404
  %v406 = vpop.f32.mrb[0].mxu0
  %407 = vmatprep.mubr.bf16.mxu0 0
  %408 = vmatmul.mubr.bf16.gmra.mrb[0].mxu0 %v332
  %v409 = vpop.f32.mrb[0].mxu0
  %v410 = vadd.f32 0.0, %v409
  %v411 = vpop.f32.mrb[0].mxu0
  %v412 = vpop.f32.mrb[0].mxu0
  %v413 = vadd.f32 0.0, %v412
  %v414 = vpop.f32.mrb[0].mxu0
  %415 = vmatprep.mubr.bf16.mxu0 0
  %416 = vmatmul.mubr.bf16.gmra.mrb[0].mxu0 %v335
  %v417 = vpop.f32.mrb[0].mxu0
  %v418 = vadd.f32 0.0, %v417
  %v419 = vpop.f32.mrb[0].mxu0
  %v420 = vpop.f32.mrb[0].mxu0
  %v421 = vadd.f32 0.0, %v420
  %v422 = vpop.f32.mrb[0].mxu0
  %423 = vmatprep.mubr.bf16.mxu0 0
  %424 = vmatmul.mubr.bf16.gmra.mrb[0].mxu0 %v338
  %v425 = vpop.f32.mrb[0].mxu0
  %v426 = vadd.f32 0.0, %v425
  %v427 = vpop.f32.mrb[0].mxu0
  %v428 = vpop.f32.mrb[0].mxu0
  %v429 = vadd.f32 0.0, %v428
  %v430 = vpop.f32.mrb[0].mxu0
  %431 = vmatprep.mubr.bf16.mxu0 0
  %432 = vmatmul.mubr.bf16.gmra.mrb[0].mxu0 %v341
  %v433 = vpop.f32.mrb[0].mxu0
  %v434 = vadd.f32 0.0, %v433
  %v435 = vpop.f32.mrb[0].mxu0
  %v436 = vpop.f32.mrb[0].mxu0
  %v437 = vadd.f32 0.0, %v436
  %v438 = vpop.f32.mrb[0].mxu0
  %439 = vdwg.mxu0
  %vm440 = vcmask 523264
  %441 = vst.msk [vmem:[%s5] sm:$0xff] %vm440, %v378
  %442 = vst.msk [vmem:[%s5 + $0x8] sm:$0xff] %vm440, %v381
  %443 = vst.msk [vmem:[%s5 + $0x10] sm:$0xff] %vm440, %v386
  %444 = vst.msk [vmem:[%s5 + $0x18] sm:$0xff] %vm440, %v389
  %445 = vst.msk [vmem:[%s5 + $0x20] sm:$0xff] %vm440, %v394
  %446 = vst.msk [vmem:[%s5 + $0x28] sm:$0xff] %vm440, %v397
  %447 = vst.msk [vmem:[%s5 + $0x30] sm:$0xff] %vm440, %v402
  %448 = vst.msk [vmem:[%s5 + $0x38] sm:$0xff] %vm440, %v405
  %449 = vst.msk [vmem:[%s5 + $0x40] sm:$0xff] %vm440, %v410
  %450 = vst.msk [vmem:[%s5 + $0x48] sm:$0xff] %vm440, %v413
  %451 = vst.msk [vmem:[%s5 + $0x50] sm:$0xff] %vm440, %v418
  %452 = vst.msk [vmem:[%s5 + $0x58] sm:$0xff] %vm440, %v421
  %453 = vst.msk [vmem:[%s5 + $0x60] sm:$0xff] %vm440, %v426
  %454 = vst.msk [vmem:[%s5 + $0x68] sm:$0xff] %vm440, %v429
  %455 = vst.msk [vmem:[%s5 + $0x70] sm:$0xff] %vm440, %v434
  %456 = vst.msk [vmem:[%s5 + $0x78] sm:$0xff] %vm440, %v437
  %v457 = vld [vmem:[%s4] sm:$0xf]
  %v458 = vld [vmem:[%s4 + $0x4] sm:$0xf]
  %v459 = vld [vmem:[%s4 + $0x8] sm:$0xf]
  %v460 = vld [vmem:[%s4 + $0xc] sm:$0xf]
  %v465 = vunpack.c.l.b16 %v457
  %v466 = vunpack.c.l.b16 %v458
  %v467 = vunpack.c.l.b16 %v459
  %v468 = vunpack.c.l.b16 %v460
  %v469 = vpack.c.b16 %v466, %v465
  %v470 = vpack.c.b16 %v468, %v467
  %473 = vmatprep.subr.bf16.mxu0 0
  %474 = vmatpush1.bf16.msra.mxu0 %v469
  %475 = vmatprep.subr.bf16.mxu0 0
  %476 = vmatpush1.bf16.msra.mxu0 %v470
  %477 = vmatprep.subr.bf16.mxu0 0
  %478 = vmatpush1.bf16.msra.mxu0 0
  %479 = vmatprep.subr.bf16.mxu0 0
  %480 = vmatpush1.bf16.msra.mxu0 0
  %481 = vmatprep.subr.bf16.mxu0 0
  %482 = vmatpush1.bf16.msra.mxu0 0
  %483 = vmatprep.subr.bf16.mxu0 0
  %484 = vmatpush1.bf16.msra.mxu0 0
  %485 = vmatprep.subr.bf16.mxu0 0
  %486 = vmatpush1.bf16.msra.mxu0 0
  %487 = vmatprep.subr.bf16.mxu0 0
  %488 = vmatpush1.bf16.msra.mxu0 0
  %489 = vmatprep.subr.bf16.mxu0 0
  %490 = vmatpush1.bf16.msra.mxu0 0
  %491 = vmatprep.subr.bf16.mxu0 0
  %492 = vmatpush1.bf16.msra.mxu0 0
  %493 = vmatprep.subr.bf16.mxu0 0
  %494 = vmatpush1.bf16.msra.mxu0 0
  %495 = vmatprep.subr.bf16.mxu0 0
  %496 = vmatpush1.bf16.msra.mxu0 0
  %497 = vmatprep.subr.bf16.mxu0 0
  %498 = vmatpush1.bf16.msra.mxu0 0
  %499 = vmatprep.subr.bf16.mxu0 0
  %500 = vmatpush1.bf16.msra.mxu0 0
  %501 = vmatprep.subr.bf16.mxu0 0
  %502 = vmatpush1.bf16.msra.mxu0 0
  %503 = vmatprep.subr.bf16.mxu0 0
  %504 = vmatpush1.bf16.msra.mxu0 0
  %505 = vmatprep.mubr.bf16.mxu0 0
  %506 = vmatmul.mubr.bf16.gmra.mrb[0].mxu0 %v320
  %v507 = vpop.f32.mrb[0].mxu0
  %v508 = vadd.f32 0.0, %v507
  %v509 = vpop.f32.mrb[0].mxu0
  %v510 = vpop.f32.mrb[0].mxu0
  %v511 = vadd.f32 0.0, %v510
  %v512 = vpop.f32.mrb[0].mxu0
  %513 = vmatprep.mubr.bf16.mxu0 0
  %514 = vmatmul.mubr.bf16.gmra.mrb[0].mxu0 %v323
  %v515 = vpop.f32.mrb[0].mxu0
  %v516 = vadd.f32 0.0, %v515
  %v517 = vpop.f32.mrb[0].mxu0
  %v518 = vpop.f32.mrb[0].mxu0
  %v519 = vadd.f32 0.0, %v518
  %v520 = vpop.f32.mrb[0].mxu0
  %521 = vmatprep.mubr.bf16.mxu0 0
  %522 = vmatmul.mubr.bf16.gmra.mrb[0].mxu0 %v326
  %v523 = vpop.f32.mrb[0].mxu0
  %v524 = vadd.f32 0.0, %v523
  %v525 = vpop.f32.mrb[0].mxu0
  %v526 = vpop.f32.mrb[0].mxu0
  %v527 = vadd.f32 0.0, %v526
  %v528 = vpop.f32.mrb[0].mxu0
  %529 = vmatprep.mubr.bf16.mxu0 0
  %530 = vmatmul.mubr.bf16.gmra.mrb[0].mxu0 %v329
  %v531 = vpop.f32.mrb[0].mxu0
  %v532 = vadd.f32 0.0, %v531
  %v533 = vpop.f32.mrb[0].mxu0
  %v534 = vpop.f32.mrb[0].mxu0
  %v535 = vadd.f32 0.0, %v534
  %v536 = vpop.f32.mrb[0].mxu0
  %537 = vmatprep.mubr.bf16.mxu0 0
  %538 = vmatmul.mubr.bf16.gmra.mrb[0].mxu0 %v332
  %v539 = vpop.f32.mrb[0].mxu0
  %v540 = vadd.f32 0.0, %v539
  %v541 = vpop.f32.mrb[0].mxu0
  %v542 = vpop.f32.mrb[0].mxu0
  %v543 = vadd.f32 0.0, %v542
  %v544 = vpop.f32.mrb[0].mxu0
  %545 = vmatprep.mubr.bf16.mxu0 0
  %546 = vmatmul.mubr.bf16.gmra.mrb[0].mxu0 %v335
  %v547 = vpop.f32.mrb[0].mxu0
  %v548 = vadd.f32 0.0, %v547
  %v549 = vpop.f32.mrb[0].mxu0
  %v550 = vpop.f32.mrb[0].mxu0
  %v551 = vadd.f32 0.0, %v550
  %v552 = vpop.f32.mrb[0].mxu0
  %553 = vmatprep.mubr.bf16.mxu0 0
  %554 = vmatmul.mubr.bf16.gmra.mrb[0].mxu0 %v338
  %v555 = vpop.f32.mrb[0].mxu0
  %v556 = vadd.f32 0.0, %v555
  %v557 = vpop.f32.mrb[0].mxu0
  %v558 = vpop.f32.mrb[0].mxu0
  %v559 = vadd.f32 0.0, %v558
  %v560 = vpop.f32.mrb[0].mxu0
  %561 = vmatprep.mubr.bf16.mxu0 0
  %562 = vmatmul.mubr.bf16.gmra.mrb[0].mxu0 %v341
  %v563 = vpop.f32.mrb[0].mxu0
  %v564 = vadd.f32 0.0, %v563
  %v565 = vpop.f32.mrb[0].mxu0
  %v566 = vpop.f32.mrb[0].mxu0
  %v567 = vadd.f32 0.0, %v566
  %v568 = vpop.f32.mrb[0].mxu0
  %569 = vdwg.mxu0
  %570 = vst.msk [vmem:[%s6] sm:$0xff] %vm440, %v508
  %571 = vst.msk [vmem:[%s6 + $0x8] sm:$0xff] %vm440, %v511
  %572 = vst.msk [vmem:[%s6 + $0x10] sm:$0xff] %vm440, %v516
  %573 = vst.msk [vmem:[%s6 + $0x18] sm:$0xff] %vm440, %v519
  %574 = vst.msk [vmem:[%s6 + $0x20] sm:$0xff] %vm440, %v524
  %575 = vst.msk [vmem:[%s6 + $0x28] sm:$0xff] %vm440, %v527
  %576 = vst.msk [vmem:[%s6 + $0x30] sm:$0xff] %vm440, %v532
  %577 = vst.msk [vmem:[%s6 + $0x38] sm:$0xff] %vm440, %v535
  %578 = vst.msk [vmem:[%s6 + $0x40] sm:$0xff] %vm440, %v540
  %579 = vst.msk [vmem:[%s6 + $0x48] sm:$0xff] %vm440, %v543
  %580 = vst.msk [vmem:[%s6 + $0x50] sm:$0xff] %vm440, %v548
  %581 = vst.msk [vmem:[%s6 + $0x58] sm:$0xff] %vm440, %v551
  %582 = vst.msk [vmem:[%s6 + $0x60] sm:$0xff] %vm440, %v556
  %583 = vst.msk [vmem:[%s6 + $0x68] sm:$0xff] %vm440, %v559
  %584 = vst.msk [vmem:[%s6 + $0x70] sm:$0xff] %vm440, %v564
  %585 = vst.msk [vmem:[%s6 + $0x78] sm:$0xff] %vm440, %v567
  // Predicated region
  $region22: #{tpu_custom_call.1} parent=0 // pred_check
    _
  $region23: #{tpu_custom_call.1} parent=0 // pred_check_branch
    %587 = sbr.rel (0) target = $region25
  $region24: #{tpu_custom_call.1} parent=0 // pred_region
    _
  $region25: #{tpu_custom_call.1} parent=0 // pred_fallthru
    _
  // Predicated region
  $region26: #{tpu_custom_call.1} parent=0 // pred_check
    _
  $region27: #{tpu_custom_call.1} parent=0 // pred_check_branch
    %589 = sbr.rel (0) target = $region29
  $region28: #{tpu_custom_call.1} parent=0 // pred_region
    _
  $region29: #{tpu_custom_call.1} parent=0 // pred_fallthru
    _
  // Predicated region
  $region30: #{tpu_custom_call.1} parent=0 // pred_check
    _
  $region31: #{tpu_custom_call.1} parent=0 // pred_check_branch
    %591 = sbr.rel (0) target = $region33
  $region32: #{tpu_custom_call.1} parent=0 // pred_region
    _
  $region33: #{tpu_custom_call.1} parent=0 // pred_fallthru
    _
  // Predicated region
  $region34: #{tpu_custom_call.1} parent=0 // pred_check
    _
  $region35: #{tpu_custom_call.1} parent=0 // pred_check_branch
    %593 = sbr.rel (0) target = $region37
  $region36: #{tpu_custom_call.1} parent=0 // pred_region
    _
  $region37: #{tpu_custom_call.1} parent=0 // pred_fallthru
    _

</llo_original>
